<compile_context>
chip_gen: v6e
topology: v6e:2x2x1
jax: 0.10.0
libtpu: 0.0.40
codegen_flags: <defaults>
</compile_context>

<pallas_src>
import functools

import jax
import jax.numpy as jnp
from jax import lax
from jax.experimental import pallas as pl
from jax.experimental.pallas import tpu as pltpu


_LANE = 128


def _round_up(n, m):
    return ((n + m - 1) // m) * m


def _choose_batch_tile(B, requested):
    """Adaptive batch tile.

    - Large B: ~`requested`-row tiles (128-multiples) so per-grid-step
      overhead amortizes over a fat MXU tile.
    - Medium B: split into at least 2 tiles so the 'parallel' grid axis has
      >=2 steps (keeps both TensorCores busy on v7x).
    - Tiny B (<=128 rows): one tile; splitting below a vreg block buys nothing.
    """
    B8 = _round_up(B, 8)
    if B8 <= _LANE:
        return B8
    n_tiles = max(2, pl.cdiv(B8, requested))
    return _round_up(pl.cdiv(B8, n_tiles), _LANE)


def _vmem_estimate(bt, d_pad):
    """Rough per-kernel VMEM need (bytes): double-buffered f32 x tile,
    bf16 weights (up to 2 buffers), biases, live activations, output."""
    x_b = 2 * bt * d_pad * 4
    w_b = 2 * (d_pad * 512 + 512 * 256 + 256 * 128 + 8 * 128) * 2
    bias_b = 2 * (512 + 256 + 128 + 1) * 4
    act_b = bt * (512 + 512 + 256 + 128) * 4
    out_b = 2 * bt * 4
    return x_b + w_b + bias_b + act_b + out_b


def _mlp_kernel(x_ref,
                w1_ref, b1_ref,
                w2_ref, b2_ref,
                w3_ref, b3_ref,
                w4_ref, b4_ref,
                o_ref):
    """Fused 4-layer MLP (relu, relu, relu, sigmoid) for one batch tile.

    x arrives f32 and is cast to bf16 here (avoids a wrapper-side HBM pass);
    weights are bf16; all matmuls accumulate in f32; bias/relu math is f32 and
    packed to bf16 only right before the next matmul. The output is written
    as a lane-dense (1, batch_tile) row.
    """
    x = x_ref[...].astype(jnp.bfloat16)                                # (bt, Dp)

    h = jnp.dot(x, w1_ref[...], preferred_element_type=jnp.float32) + b1_ref[...]
    h = jnp.maximum(h, 0.0).astype(jnp.bfloat16)                       # (bt, 512)

    h = jnp.dot(h, w2_ref[...], preferred_element_type=jnp.float32) + b2_ref[...]
    h = jnp.maximum(h, 0.0).astype(jnp.bfloat16)                       # (bt, 256)

    h = jnp.dot(h, w3_ref[...], preferred_element_type=jnp.float32) + b3_ref[...]
    h = jnp.maximum(h, 0.0).astype(jnp.bfloat16)                       # (bt, 128)

    # fc4: contract the 128-wide feature axis of h against the bf16 w4
    # row-block (rows 1..7 are zero padding). Single bf16 MXU pass yielding a
    # lane-dense (1, bt) logits row instead of a (bt, 1) masked-store column.
    out8 = lax.dot_general(
        w4_ref[...], h,
        dimension_numbers=(((1,), (1,)), ((), ())),
        preferred_element_type=jnp.float32)                            # (8, bt)
    logits = out8[0:1, :] + b4_ref[...]                                # (1, bt)
    o_ref[...] = jax.nn.sigmoid(logits).astype(o_ref.dtype)


@functools.partial(jax.jit, static_argnames=("batch_tile",))
def discriminator_forward(x, params, *, batch_tile=512):
    """x: (B, input_dim) f32. Returns (B, 1) f32 in [0, 1]."""
    w1, b1, w2, b2, w3, b3, w4, b4 = params   # w*: (in, out) f32, b*: (1, out) f32
    B, D = x.shape

    bt = _choose_batch_tile(B, batch_tile)
    B_pad = _round_up(B, bt)
    D_pad = _round_up(D, _LANE)

    bf16 = jnp.bfloat16

    # x stays f32 (cast to bf16 inside the kernel). Aligned case: passed
    # straight through with no wrapper HBM pass. Unaligned case: one exact
    # f32 zero-pad (padding rows/cols contribute nothing to x @ W).
    if B_pad == B and D_pad == D:
        x_p = x
    else:
        x_p = jnp.pad(x, ((0, B_pad - B), (0, D_pad - D)))

    w1_c = (jnp.pad(w1, ((0, D_pad - D), (0, 0))) if D_pad != D else w1).astype(bf16)
    w2_c = w2.astype(bf16)
    w3_c = w3.astype(bf16)
    # fc4 weights as a bf16 8x128 row block (row 0 real, rest zero).
    w4_rows = jnp.zeros((8, 128), bf16).at[0].set(w4[:, 0].astype(bf16))

    def const_spec(shape):
        zeros = (0,) * len(shape)
        return pl.BlockSpec(shape, lambda i: zeros)

    # w1 is the only weight that scales with input_dim. Its index_map is
    # constant, so the second pipeline buffer is pure VMEM waste once w1 is
    # multi-MiB (matters on v7x's 64 MiB VMEM); single-buffer it then. Small
    # weights keep the default spec. For extremely large input_dim a K-tiled
    # reduction grid axis over D_pad would be the next step.
    if D_pad * 512 * 2 >= (4 << 20):
        w1_spec = pl.BlockSpec(w1_c.shape, lambda i: (0, 0),
                               pipeline_mode=pl.Buffered(1))
    else:
        w1_spec = const_spec(w1_c.shape)

    grid = (B_pad // bt,)

    cp_kwargs = dict(dimension_semantics=("parallel",))
    est = _vmem_estimate(bt, D_pad)
    if est > (28 << 20):
        # Only raise the scoped VMEM limit when actually needed, with
        # headroom -- never blanket-request the whole 64 MiB of a v7x core.
        cp_kwargs["vmem_limit_bytes"] = int(min(est + (8 << 20), 120 << 20))

    out = pl.pallas_call(
        _mlp_kernel,
        out_shape=jax.ShapeDtypeStruct((1, B_pad), jnp.float32),
        grid_spec=pltpu.PrefetchScalarGridSpec(
            num_scalar_prefetch=0,
            grid=grid,
            in_specs=[
                pl.BlockSpec((bt, D_pad), lambda i: (i, 0)),   # x batch tile (f32)
                w1_spec, const_spec(b1.shape),
                const_spec(w2_c.shape), const_spec(b2.shape),
                const_spec(w3_c.shape), const_spec(b3.shape),
                const_spec(w4_rows.shape), const_spec(b4.shape),
            ],
            # Lane-dense (1, bt) logits row per step: unmasked vector stores.
            out_specs=pl.BlockSpec((1, bt), lambda i: (0, i)),
        ),
        compiler_params=pltpu.CompilerParams(**cp_kwargs),
    )(x_p, w1_c, b1, w2_c, b2, w3_c, b3, w4_rows, b4)

    # Lane-dense (1, B_pad) row back to the module's (B, 1) column.
    return out[0, :B][:, None]


def init_params(key, input_dim):
    """PyTorch nn.Linear-style init; weights stored transposed as (in, out),
    biases kept 2D (1, out) for TPU-friendly layout."""
    dims = [(input_dim, 512), (512, 256), (256, 128), (128, 1)]
    params = []
    for i, (din, dout) in enumerate(dims):
        kw, kb = jax.random.split(jax.random.fold_in(key, i))
        bound = 1.0 / jnp.sqrt(jnp.float32(din))
        w = jax.random.uniform(kw, (din, dout), jnp.float32, -bound, bound)
        b = jax.random.uniform(kb, (1, dout), jnp.float32, -bound, bound)
        params += [w, b]
    return tuple(params)


def _reference_forward(x, params):
    """Pure-JAX reference using the same bf16-operand / f32-accumulate scheme."""
    w1, b1, w2, b2, w3, b3, w4, b4 = params
    bf16 = jnp.bfloat16
    h = x.astype(bf16)
    h = jnp.maximum(jnp.dot(h, w1.astype(bf16),
                            preferred_element_type=jnp.float32) + b1, 0.0).astype(bf16)
    h = jnp.maximum(jnp.dot(h, w2.astype(bf16),
                            preferred_element_type=jnp.float32) + b2, 0.0).astype(bf16)
    h = jnp.maximum(jnp.dot(h, w3.astype(bf16),
                            preferred_element_type=jnp.float32) + b3, 0.0).astype(bf16)
    logits = jnp.dot(h, w4.astype(bf16),
                     preferred_element_type=jnp.float32) + b4
    return jax.nn.sigmoid(logits)


if __name__ == "__main__":
    key = jax.random.PRNGKey(0)

    # Case 1: fully aligned fast path (no wrapper-side copy of x, one tile).
    # Case 2: unaligned batch & feature dims (exercises padding + 2 grid steps).
    cases = [(96, 128), (300, 100)]
    for idx, (batch, input_dim) in enumerate(cases):
        k_x = jax.random.fold_in(key, idx)
        k_p = jax.random.fold_in(key, 100 + idx)
        x = jax.random.normal(k_x, (batch, input_dim), jnp.float32)
        params = init_params(k_p, input_dim)

        out = jax.block_until_ready(discriminator_forward(x, params))
        ref = _reference_forward(x, params)

        assert out.shape == (batch, 1), out.shape
        err = float(jnp.max(jnp.abs(out - ref)))
        assert err < 2e-3, f"case {idx}: max abs err {err} vs reference"

    print("KERNEL_OK")
</pallas_src>

<mosaic_0001>
module attributes {stable_mosaic.version = 11 : i64} {
  func.func @_mlp_kernel(%arg0: i32, %arg1: memref<96x128xf32, #tpu.memory_space<vmem>>, %arg2: memref<128x512xbf16, #tpu.memory_space<vmem>>, %arg3: memref<1x512xf32, #tpu.memory_space<vmem>>, %arg4: memref<512x256xbf16, #tpu.memory_space<vmem>>, %arg5: memref<1x256xf32, #tpu.memory_space<vmem>>, %arg6: memref<256x128xbf16, #tpu.memory_space<vmem>>, %arg7: memref<1x128xf32, #tpu.memory_space<vmem>>, %arg8: memref<8x128xbf16, #tpu.memory_space<vmem>>, %arg9: memref<1x1xf32, #tpu.memory_space<vmem>>, %arg10: memref<1x96xf32, #tpu.memory_space<vmem>>) attributes {dimension_semantics = [#tpu.dimension_semantics<parallel>], iteration_bounds = array<i64: 1>, scalar_prefetch = 0 : i64, scratch_operands = 0 : i64, tpu.core_type = #tpu.core_type<tc>, window_params = [{transform_indices = @transform_0, window_bounds = array<i64: 96, 128>}, {pipeline_mode = #tpu.pipeline_mode<synchronous>, transform_indices = @transform_1, window_bounds = array<i64: 128, 512>}, {pipeline_mode = #tpu.pipeline_mode<synchronous>, transform_indices = @transform_2, window_bounds = array<i64: 1, 512>}, {pipeline_mode = #tpu.pipeline_mode<synchronous>, transform_indices = @transform_3, window_bounds = array<i64: 512, 256>}, {pipeline_mode = #tpu.pipeline_mode<synchronous>, transform_indices = @transform_4, window_bounds = array<i64: 1, 256>}, {pipeline_mode = #tpu.pipeline_mode<synchronous>, transform_indices = @transform_5, window_bounds = array<i64: 256, 128>}, {pipeline_mode = #tpu.pipeline_mode<synchronous>, transform_indices = @transform_6, window_bounds = array<i64: 1, 128>}, {pipeline_mode = #tpu.pipeline_mode<synchronous>, transform_indices = @transform_7, window_bounds = array<i64: 8, 128>}, {pipeline_mode = #tpu.pipeline_mode<synchronous>, transform_indices = @transform_8, window_bounds = array<i64: 1, 1>}, {transform_indices = @transform_9, window_bounds = array<i64: 1, 96>}]} {
    %c0 = arith.constant 0 : index
    %c0_0 = arith.constant 0 : index
    %0 = vector.load %arg1[%c0, %c0_0] : memref<96x128xf32, #tpu.memory_space<vmem>>, vector<96x128xf32>
    %1 = arith.truncf %0 : vector<96x128xf32> to vector<96x128xbf16>
    %c0_1 = arith.constant 0 : index
    %c0_2 = arith.constant 0 : index
    %2 = vector.load %arg2[%c0_1, %c0_2] : memref<128x512xbf16, #tpu.memory_space<vmem>>, vector<128x512xbf16>
    %cst = arith.constant dense<0.000000e+00> : vector<96x512xf32>
    %3 = tpu.matmul %1, %2, %cst {dimension_numbers = #tpu.dot_dimension_numbers<[1], [0], [0], [1], [0, 0, 1, 1], [], []>} : vector<96x128xbf16>, vector<128x512xbf16>, vector<96x512xf32> -> vector<96x512xf32>
    %c0_3 = arith.constant 0 : index
    %c0_4 = arith.constant 0 : index
    %4 = vector.load %arg3[%c0_3, %c0_4] : memref<1x512xf32, #tpu.memory_space<vmem>>, vector<1x512xf32>
    %5 = vector.broadcast %4 : vector<1x512xf32> to vector<96x512xf32>
    %6 = arith.addf %3, %5 : vector<96x512xf32>
    %cst_5 = arith.constant 0.000000e+00 : f32
    %7 = vector.broadcast %cst_5 : f32 to vector<96x512xf32>
    %8 = arith.maximumf %6, %7 : vector<96x512xf32>
    %9 = arith.truncf %8 : vector<96x512xf32> to vector<96x512xbf16>
    %c0_6 = arith.constant 0 : index
    %c0_7 = arith.constant 0 : index
    %10 = vector.load %arg4[%c0_6, %c0_7] : memref<512x256xbf16, #tpu.memory_space<vmem>>, vector<512x256xbf16>
    %cst_8 = arith.constant dense<0.000000e+00> : vector<96x256xf32>
    %11 = tpu.matmul %9, %10, %cst_8 {dimension_numbers = #tpu.dot_dimension_numbers<[1], [0], [0], [1], [0, 0, 1, 1], [], []>} : vector<96x512xbf16>, vector<512x256xbf16>, vector<96x256xf32> -> vector<96x256xf32>
    %c0_9 = arith.constant 0 : index
    %c0_10 = arith.constant 0 : index
    %12 = vector.load %arg5[%c0_9, %c0_10] : memref<1x256xf32, #tpu.memory_space<vmem>>, vector<1x256xf32>
    %13 = vector.broadcast %12 : vector<1x256xf32> to vector<96x256xf32>
    %14 = arith.addf %11, %13 : vector<96x256xf32>
    %cst_11 = arith.constant 0.000000e+00 : f32
    %15 = vector.broadcast %cst_11 : f32 to vector<96x256xf32>
    %16 = arith.maximumf %14, %15 : vector<96x256xf32>
    %17 = arith.truncf %16 : vector<96x256xf32> to vector<96x256xbf16>
    %c0_12 = arith.constant 0 : index
    %c0_13 = arith.constant 0 : index
    %18 = vector.load %arg6[%c0_12, %c0_13] : memref<256x128xbf16, #tpu.memory_space<vmem>>, vector<256x128xbf16>
    %cst_14 = arith.constant dense<0.000000e+00> : vector<96x128xf32>
    %19 = tpu.matmul %17, %18, %cst_14 {dimension_numbers = #tpu.dot_dimension_numbers<[1], [0], [0], [1], [0, 0, 1, 1], [], []>} : vector<96x256xbf16>, vector<256x128xbf16>, vector<96x128xf32> -> vector<96x128xf32>
    %c0_15 = arith.constant 0 : index
    %c0_16 = arith.constant 0 : index
    %20 = vector.load %arg7[%c0_15, %c0_16] : memref<1x128xf32, #tpu.memory_space<vmem>>, vector<1x128xf32>
    %21 = vector.broadcast %20 : vector<1x128xf32> to vector<96x128xf32>
    %22 = arith.addf %19, %21 : vector<96x128xf32>
    %cst_17 = arith.constant 0.000000e+00 : f32
    %23 = vector.broadcast %cst_17 : f32 to vector<96x128xf32>
    %24 = arith.maximumf %22, %23 : vector<96x128xf32>
    %25 = arith.truncf %24 : vector<96x128xf32> to vector<96x128xbf16>
    %c0_18 = arith.constant 0 : index
    %c0_19 = arith.constant 0 : index
    %26 = vector.load %arg8[%c0_18, %c0_19] : memref<8x128xbf16, #tpu.memory_space<vmem>>, vector<8x128xbf16>
    %cst_20 = arith.constant dense<0.000000e+00> : vector<8x96xf32>
    %27 = tpu.matmul %26, %25, %cst_20 {dimension_numbers = #tpu.dot_dimension_numbers<[1], [1], [0], [0], [0, 0, 1, 0], [], []>} : vector<8x128xbf16>, vector<96x128xbf16>, vector<8x96xf32> -> vector<8x96xf32>
    %28 = vector.extract_strided_slice %27 {offsets = [0, 0], sizes = [1, 96], strides = [1, 1]} : vector<8x96xf32> to vector<1x96xf32>
    %c0_21 = arith.constant 0 : index
    %c0_22 = arith.constant 0 : index
    %29 = vector.load %arg9[%c0_21, %c0_22] : memref<1x1xf32, #tpu.memory_space<vmem>>, vector<1x1xf32>
    %30 = vector.broadcast %29 : vector<1x1xf32> to vector<1x96xf32>
    %31 = arith.addf %28, %30 : vector<1x96xf32>
    %32 = arith.negf %31 : vector<1x96xf32>
    %33 = math.exp %32 : vector<1x96xf32>
    %cst_23 = arith.constant 1.000000e+00 : f32
    %34 = vector.broadcast %cst_23 : f32 to vector<1x96xf32>
    %35 = arith.addf %34, %33 : vector<1x96xf32>
    %36 = arith.divf %34, %35 : vector<1x96xf32>
    %c0_24 = arith.constant 0 : index
    %c0_25 = arith.constant 0 : index
    %37 = vector.load %arg10[%c0_24, %c0_25] : memref<1x96xf32, #tpu.memory_space<vmem>>, vector<1x96xf32>
    tpu.vector_store %arg10[%c0_24, %c0_25], %36 {strides = array<i32>} : memref<1x96xf32, #tpu.memory_space<vmem>>, vector<1x96xf32>,
    return
  }
  func.func @transform_0(%arg0: i32) -> (i32, i32) {
    %c0_i32 = arith.constant 0 : i32
    %c0_i32_0 = arith.constant 0 : i32
    return %arg0, %c0_i32 : i32, i32
  }
  func.func @transform_1(%arg0: i32) -> (i32, i32) {
    %c0_i32 = arith.constant 0 : i32
    %c0_i32_0 = arith.constant 0 : i32
    %c0_i32_1 = arith.constant 0 : i32
    return %c0_i32, %c0_i32_0 : i32, i32
  }
  func.func @transform_2(%arg0: i32) -> (i32, i32) {
    %c0_i32 = arith.constant 0 : i32
    %c0_i32_0 = arith.constant 0 : i32
    %c0_i32_1 = arith.constant 0 : i32
    return %c0_i32, %c0_i32_0 : i32, i32
  }
  func.func @transform_3(%arg0: i32) -> (i32, i32) {
    %c0_i32 = arith.constant 0 : i32
    %c0_i32_0 = arith.constant 0 : i32
    %c0_i32_1 = arith.constant 0 : i32
    return %c0_i32, %c0_i32_0 : i32, i32
  }
  func.func @transform_4(%arg0: i32) -> (i32, i32) {
    %c0_i32 = arith.constant 0 : i32
    %c0_i32_0 = arith.constant 0 : i32
    %c0_i32_1 = arith.constant 0 : i32
    return %c0_i32, %c0_i32_0 : i32, i32
  }
  func.func @transform_5(%arg0: i32) -> (i32, i32) {
    %c0_i32 = arith.constant 0 : i32
    %c0_i32_0 = arith.constant 0 : i32
    %c0_i32_1 = arith.constant 0 : i32
    return %c0_i32, %c0_i32_0 : i32, i32
  }
  func.func @transform_6(%arg0: i32) -> (i32, i32) {
    %c0_i32 = arith.constant 0 : i32
    %c0_i32_0 = arith.constant 0 : i32
    %c0_i32_1 = arith.constant 0 : i32
    return %c0_i32, %c0_i32_0 : i32, i32
  }
  func.func @transform_7(%arg0: i32) -> (i32, i32) {
    %c0_i32 = arith.constant 0 : i32
    %c0_i32_0 = arith.constant 0 : i32
    %c0_i32_1 = arith.constant 0 : i32
    return %c0_i32, %c0_i32_0 : i32, i32
  }
  func.func @transform_8(%arg0: i32) -> (i32, i32) {
    %c0_i32 = arith.constant 0 : i32
    %c0_i32_0 = arith.constant 0 : i32
    %c0_i32_1 = arith.constant 0 : i32
    return %c0_i32, %c0_i32_0 : i32, i32
  }
  func.func @transform_9(%arg0: i32) -> (i32, i32) {
    %c0_i32 = arith.constant 0 : i32
    %c0_i32_0 = arith.constant 0 : i32
    return %c0_i32, %arg0 : i32, i32
  }
}

</mosaic_0001>

<llo_original>
// kernel: discriminator_forward.1
$region0: #{discriminator_forward.1}
  #allocation0 [shape = 'u32[]', space=smem, size = 0x4, offset = 0x4, fixed_abs, tag = 'smem constant byte address 0x4 - core index']
  #allocation1 [shape = 'u32[144,128]{1,0:T(1,128)}', space=vmem, size = 0x12000, scoped, tag = 'internal scratch']
  #allocation2 [shape = 'f32[1,1]{1,0:T(1,128)S(1)}', space=vmem, size = 0x200, scoped, tag = 'scoped memory for discriminator_forward.1']
  %s0 = inlined_call_operand.vmem [shape: f32[96,128], index: 0, kind: input, shape index: {}]
  %s1 = inlined_call_operand.vmem [shape: bf16[128,512], index: 1, kind: input, shape index: {}]
  %s2 = inlined_call_operand.vmem [shape: f32[1,512], index: 2, kind: input, shape index: {}]
  %s3 = inlined_call_operand.vmem [shape: bf16[512,256], index: 3, kind: input, shape index: {}]
  %s4 = inlined_call_operand.vmem [shape: f32[1,256], index: 4, kind: input, shape index: {}]
  %s5 = inlined_call_operand.vmem [shape: bf16[256,128], index: 5, kind: input, shape index: {}]
  %s6 = inlined_call_operand.vmem [shape: f32[1,128], index: 6, kind: input, shape index: {}]
  %s7 = inlined_call_operand.vmem [shape: bf16[8,128], index: 7, kind: input, shape index: {}]
  %s8 = inlined_call_operand.<no memory space> [shape: f32[1,1], index: 8, kind: input, shape index: {}]
  %s9 = inlined_call_operand.hbm [shape: f32[1,96], index: 9, kind: output, shape index: {}]
  %s10 = sld [smem:[#allocation0]]
  $region46: #{discriminator_forward.1} parent=0
    _
  %s12 = ssub.s32 1, %s10
  %s13 = scalar_select 0, %s12, %s10
  %v14 = vstv %s8
  %15 = vst [vmem:[#allocation2] sm:$0x1] %v14
  $region1: #{discriminator_forward.1} parent=0
    #allocation3 [shape = 'u8[512]{0}', space=vmem, size = 0x400, scoped, tag = 'output window, operand 0, single buffered']
    #allocation4 [shape = 's32[1]{0}', space=sflag, size = 0x4, scoped, tag = 'scoped memory for discriminator_forward.1']
    %16 = vsyncpa [#allocation4], 0
    // Predicated region
    $region2: #{discriminator_forward.1} parent=1 // pred_check
      _
    $region3: #{discriminator_forward.1} parent=1 // pred_check_branch
      %18 = sbr.rel (0) target = $region5
    $region4: #{discriminator_forward.1} parent=1 // pred_region
      _
    $region5: #{discriminator_forward.1} parent=1 // pred_fallthru
      _
    // Predicated region
    $region6: #{discriminator_forward.1} parent=1 // pred_check
      _
    $region7: #{discriminator_forward.1} parent=1 // pred_check_branch
      %20 = sbr.rel (0) target = $region9
    $region8: #{discriminator_forward.1} parent=1 // pred_region
      _
    $region9: #{discriminator_forward.1} parent=1 // pred_fallthru
      _
    // Predicated region
    $region10: #{discriminator_forward.1} parent=1 // pred_check
      _
    $region11: #{discriminator_forward.1} parent=1 // pred_check_branch
      %22 = sbr.rel (0) target = $region13
    $region12: #{discriminator_forward.1} parent=1 // pred_region
      _
    $region13: #{discriminator_forward.1} parent=1 // pred_fallthru
      _
    // Predicated region
    $region14: #{discriminator_forward.1} parent=1 // pred_check
      _
    $region15: #{discriminator_forward.1} parent=1 // pred_check_branch
      %24 = sbr.rel (0) target = $region17
    $region16: #{discriminator_forward.1} parent=1 // pred_region
      _
    $region17: #{discriminator_forward.1} parent=1 // pred_fallthru
      _
    // Predicated region
    $region18: #{discriminator_forward.1} parent=1 // pred_check
      _
    $region19: #{discriminator_forward.1} parent=1 // pred_check_branch
      %26 = sbr.rel (0) target = $region21
    $region20: #{discriminator_forward.1} parent=1 // pred_region
      _
    $region21: #{discriminator_forward.1} parent=1 // pred_fallthru
      _
    // Predicated region
    $region22: #{discriminator_forward.1} parent=1 // pred_check
      _
    $region23: #{discriminator_forward.1} parent=1 // pred_check_branch
      %28 = sbr.rel (0) target = $region25
    $region24: #{discriminator_forward.1} parent=1 // pred_region
      _
    $region25: #{discriminator_forward.1} parent=1 // pred_fallthru
      _
    // Predicated region
    $region26: #{discriminator_forward.1} parent=1 // pred_check
      _
    $region27: #{discriminator_forward.1} parent=1 // pred_check_branch
      %30 = sbr.rel (0) target = $region29
    $region28: #{discriminator_forward.1} parent=1 // pred_region
      _
    $region29: #{discriminator_forward.1} parent=1 // pred_fallthru
      _
    // Predicated region
    $region30: #{discriminator_forward.1} parent=1 // pred_check
      _
    $region31: #{discriminator_forward.1} parent=1 // pred_check_branch
      %32 = sbr.rel (0) target = $region33
    $region32: #{discriminator_forward.1} parent=1 // pred_region
      _
    $region33: #{discriminator_forward.1} parent=1 // pred_fallthru
      _
    // Predicated region
    $region34: #{discriminator_forward.1} parent=1 // pred_check
      _
    $region35: #{discriminator_forward.1} parent=1 // pred_check_branch
      %34 = sbr.rel (0) target = $region37
    $region36: #{discriminator_forward.1} parent=1 // pred_region
      _
    $region37: #{discriminator_forward.1} parent=1 // pred_fallthru
      _
    %v36 = vld [vmem:[%s0] sm:$0xff]
    %v37 = vld [vmem:[%s0 + $0x8] sm:$0xff]
    %v38 = vld [vmem:[%s0 + $0x10] sm:$0xff]
    %v39 = vld [vmem:[%s0 + $0x18] sm:$0xff]
    %v40 = vld [vmem:[%s0 + $0x20] sm:$0xff]
    %v41 = vld [vmem:[%s0 + $0x28] sm:$0xff]
    %v42 = vld [vmem:[%s0 + $0x30] sm:$0xff]
    %v43 = vld [vmem:[%s0 + $0x38] sm:$0xff]
    %v44 = vld [vmem:[%s0 + $0x40] sm:$0xff]
    %v45 = vld [vmem:[%s0 + $0x48] sm:$0xff]
    %v46 = vld [vmem:[%s0 + $0x50] sm:$0xff]
    %v47 = vld [vmem:[%s0 + $0x58] sm:$0xff]
    %v48 = vpack.c.bf16 %v37, %v36
    %v49 = vpack.c.bf16 %v39, %v38
    %v50 = vpack.c.bf16 %v41, %v40
    %v51 = vpack.c.bf16 %v43, %v42
    %v52 = vpack.c.bf16 %v45, %v44
    %v53 = vpack.c.bf16 %v47, %v46
    %v54 = vld [vmem:[%s1] sm:$0xff]
    %v55 = vld [vmem:[%s1 + $0x8] sm:$0xff]
    %v56 = vld [vmem:[%s1 + $0x10] sm:$0xff]
    %v57 = vld [vmem:[%s1 + $0x18] sm:$0xff]
    %v58 = vld [vmem:[%s1 + $0x20] sm:$0xff]
    %v59 = vld [vmem:[%s1 + $0x28] sm:$0xff]
    %v60 = vld [vmem:[%s1 + $0x30] sm:$0xff]
    %v61 = vld [vmem:[%s1 + $0x38] sm:$0xff]
    %v62 = vld [vmem:[%s1 + $0x40] sm:$0xff]
    %v63 = vld [vmem:[%s1 + $0x48] sm:$0xff]
    %v64 = vld [vmem:[%s1 + $0x50] sm:$0xff]
    %v65 = vld [vmem:[%s1 + $0x58] sm:$0xff]
    %v66 = vld [vmem:[%s1 + $0x60] sm:$0xff]
    %v67 = vld [vmem:[%s1 + $0x68] sm:$0xff]
    %v68 = vld [vmem:[%s1 + $0x70] sm:$0xff]
    %v69 = vld [vmem:[%s1 + $0x78] sm:$0xff]
    %v70 = vld [vmem:[%s1 + $0x80] sm:$0xff]
    %v71 = vld [vmem:[%s1 + $0x88] sm:$0xff]
    %v72 = vld [vmem:[%s1 + $0x90] sm:$0xff]
    %v73 = vld [vmem:[%s1 + $0x98] sm:$0xff]
    %v74 = vld [vmem:[%s1 + $0xa0] sm:$0xff]
    %v75 = vld [vmem:[%s1 + $0xa8] sm:$0xff]
    %v76 = vld [vmem:[%s1 + $0xb0] sm:$0xff]
    %v77 = vld [vmem:[%s1 + $0xb8] sm:$0xff]
    %v78 = vld [vmem:[%s1 + $0xc0] sm:$0xff]
    %v79 = vld [vmem:[%s1 + $0xc8] sm:$0xff]
    %v80 = vld [vmem:[%s1 + $0xd0] sm:$0xff]
    %v81 = vld [vmem:[%s1 + $0xd8] sm:$0xff]
    %v82 = vld [vmem:[%s1 + $0xe0] sm:$0xff]
    %v83 = vld [vmem:[%s1 + $0xe8] sm:$0xff]
    %v84 = vld [vmem:[%s1 + $0xf0] sm:$0xff]
    %v85 = vld [vmem:[%s1 + $0xf8] sm:$0xff]
    %v86 = vld [vmem:[%s2] sm:$0xf]
    %v88 = vlaneseq
    %v89 = vshrl.u32 %v88, 7
    %v90 = vsub.s32 0, %v89
    %v91 = vrot.slane %v86, %v90
    %v92 = vlaneseq
    %v93 = vshrl.u32 %v92, 7
    %v94 = vsub.s32 1, %v93
    %v95 = vrot.slane %v86, %v94
    %v96 = vlaneseq
    %v97 = vshrl.u32 %v96, 7
    %v98 = vsub.s32 2, %v97
    %v99 = vrot.slane %v86, %v98
    %v100 = vlaneseq
    %v101 = vshrl.u32 %v100, 7
    %v102 = vsub.s32 3, %v101
    %v103 = vrot.slane %v86, %v102
    %v140 = vunpack.c.l.b16 %v54
    %v141 = vunpack.c.h.b16 %v54
    %v142 = vunpack.c.l.b16 %v55
    %v143 = vunpack.c.h.b16 %v55
    %v144 = vunpack.c.l.b16 %v56
    %v145 = vunpack.c.h.b16 %v56
    %v146 = vunpack.c.l.b16 %v57
    %v147 = vunpack.c.h.b16 %v57
    %v148 = vunpack.c.l.b16 %v58
    %v149 = vunpack.c.h.b16 %v58
    %v150 = vunpack.c.l.b16 %v59
    %v151 = vunpack.c.h.b16 %v59
    %v152 = vunpack.c.l.b16 %v60
    %v153 = vunpack.c.h.b16 %v60
    %v154 = vunpack.c.l.b16 %v61
    %v155 = vunpack.c.h.b16 %v61
    %v156 = vunpack.c.l.b16 %v62
    %v157 = vunpack.c.h.b16 %v62
    %v158 = vunpack.c.l.b16 %v63
    %v159 = vunpack.c.h.b16 %v63
    %v160 = vunpack.c.l.b16 %v64
    %v161 = vunpack.c.h.b16 %v64
    %v162 = vunpack.c.l.b16 %v65
    %v163 = vunpack.c.h.b16 %v65
    %v164 = vunpack.c.l.b16 %v66
    %v165 = vunpack.c.h.b16 %v66
    %v166 = vunpack.c.l.b16 %v67
    %v167 = vunpack.c.h.b16 %v67
    %v168 = vunpack.c.l.b16 %v68
    %v169 = vunpack.c.h.b16 %v68
    %v170 = vunpack.c.l.b16 %v69
    %v171 = vunpack.c.h.b16 %v69
    %v172 = vunpack.c.l.b16 %v70
    %v173 = vunpack.c.h.b16 %v70
    %v174 = vunpack.c.l.b16 %v71
    %v175 = vunpack.c.h.b16 %v71
    %v176 = vunpack.c.l.b16 %v72
    %v177 = vunpack.c.h.b16 %v72
    %v178 = vunpack.c.l.b16 %v73
    %v179 = vunpack.c.h.b16 %v73
    %v180 = vunpack.c.l.b16 %v74
    %v181 = vunpack.c.h.b16 %v74
    %v182 = vunpack.c.l.b16 %v75
    %v183 = vunpack.c.h.b16 %v75
    %v184 = vunpack.c.l.b16 %v76
    %v185 = vunpack.c.h.b16 %v76
    %v186 = vunpack.c.l.b16 %v77
    %v187 = vunpack.c.h.b16 %v77
    %v188 = vunpack.c.l.b16 %v78
    %v189 = vunpack.c.h.b16 %v78
    %v190 = vunpack.c.l.b16 %v79
    %v191 = vunpack.c.h.b16 %v79
    %v192 = vunpack.c.l.b16 %v80
    %v193 = vunpack.c.h.b16 %v80
    %v194 = vunpack.c.l.b16 %v81
    %v195 = vunpack.c.h.b16 %v81
    %v196 = vunpack.c.l.b16 %v82
    %v197 = vunpack.c.h.b16 %v82
    %v198 = vunpack.c.l.b16 %v83
    %v199 = vunpack.c.h.b16 %v83
    %v200 = vunpack.c.l.b16 %v84
    %v201 = vunpack.c.h.b16 %v84
    %v202 = vunpack.c.l.b16 %v85
    %v203 = vunpack.c.h.b16 %v85
    %v204 = vpack.c.b16 %v144, %v140
    %v205 = vpack.c.b16 %v145, %v141
    %v206 = vpack.c.b16 %v146, %v142
    %v207 = vpack.c.b16 %v147, %v143
    %v208 = vpack.c.b16 %v152, %v148
    %v209 = vpack.c.b16 %v153, %v149
    %v210 = vpack.c.b16 %v154, %v150
    %v211 = vpack.c.b16 %v155, %v151
    %v212 = vpack.c.b16 %v160, %v156
    %v213 = vpack.c.b16 %v161, %v157
    %v214 = vpack.c.b16 %v162, %v158
    %v215 = vpack.c.b16 %v163, %v159
    %v216 = vpack.c.b16 %v168, %v164
    %v217 = vpack.c.b16 %v169, %v165
    %v218 = vpack.c.b16 %v170, %v166
    %v219 = vpack.c.b16 %v171, %v167
    %v220 = vpack.c.b16 %v176, %v172
    %v221 = vpack.c.b16 %v177, %v173
    %v222 = vpack.c.b16 %v178, %v174
    %v223 = vpack.c.b16 %v179, %v175
    %v224 = vpack.c.b16 %v184, %v180
    %v225 = vpack.c.b16 %v185, %v181
    %v226 = vpack.c.b16 %v186, %v182
    %v227 = vpack.c.b16 %v187, %v183
    %v228 = vpack.c.b16 %v192, %v188
    %v229 = vpack.c.b16 %v193, %v189
    %v230 = vpack.c.b16 %v194, %v190
    %v231 = vpack.c.b16 %v195, %v191
    %v232 = vpack.c.b16 %v200, %v196
    %v233 = vpack.c.b16 %v201, %v197
    %v234 = vpack.c.b16 %v202, %v198
    %v235 = vpack.c.b16 %v203, %v199
    %268 = vmatprep.subr.bf16.mxu0 %v233
    %269 = vmatpush1.bf16.msra.mxu0 %v232
    %270 = vmatprep.subr.bf16.mxu0 %v229
    %271 = vmatpush1.bf16.msra.mxu0 %v228
    %272 = vmatprep.subr.bf16.mxu0 %v225
    %273 = vmatpush1.bf16.msra.mxu0 %v224
    %274 = vmatprep.subr.bf16.mxu0 %v221
    %275 = vmatpush1.bf16.msra.mxu0 %v220
    %276 = vmatprep.subr.bf16.mxu0 %v217
    %277 = vmatpush1.bf16.msra.mxu0 %v216
    %278 = vmatprep.subr.bf16.mxu0 %v213
    %279 = vmatpush1.bf16.msra.mxu0 %v212
    %280 = vmatprep.subr.bf16.mxu0 %v209
    %281 = vmatpush1.bf16.msra.mxu0 %v208
    %282 = vmatprep.subr.bf16.mxu0 %v205
    %283 = vmatpush1.bf16.msra.mxu0 %v204
    %284 = vmatprep.subr.bf16.mxu0 0
    %285 = vmatpush2.bf16.msra.mxu0 0
    %286 = vmatprep.subr.bf16.mxu0 0
    %287 = vmatpush2.bf16.msra.mxu0 0
    %288 = vmatprep.subr.bf16.mxu0 0
    %289 = vmatpush2.bf16.msra.mxu0 0
    %290 = vmatprep.subr.bf16.mxu0 0
    %291 = vmatpush2.bf16.msra.mxu0 0
    %292 = vmatprep.subr.bf16.mxu0 0
    %293 = vmatpush2.bf16.msra.mxu0 0
    %294 = vmatprep.subr.bf16.mxu0 0
    %295 = vmatpush2.bf16.msra.mxu0 0
    %296 = vmatprep.subr.bf16.mxu0 0
    %297 = vmatpush2.bf16.msra.mxu0 0
    %298 = vmatprep.subr.bf16.mxu0 0
    %299 = vmatpush2.bf16.msra.mxu0 0
    %300 = vmatprep.mubr.bf16.mxu0 0
    %301 = vmatmul.mubr.bf16.gmra.mxu0 %v48
    %v302 = vpop.f32.mrf.mxu0
    %v303 = vadd.f32 %v91, %v302
    %v304 = vpop.f32.mrf.mxu0
    %v305 = vadd.f32 %v95, %v304
    %v306 = vpop.f32.mrf.mxu0
    %v307 = vadd.f32 %v91, %v306
    %v308 = vpop.f32.mrf.mxu0
    %v309 = vadd.f32 %v95, %v308
    %310 = vmatprep.mubr.bf16.mxu0 0
    %311 = vmatmul.mubr.bf16.gmra.mxu0 %v49
    %v312 = vpop.f32.mrf.mxu0
    %v313 = vadd.f32 %v91, %v312
    %v314 = vpop.f32.mrf.mxu0
    %v315 = vadd.f32 %v95, %v314
    %v316 = vpop.f32.mrf.mxu0
    %v317 = vadd.f32 %v91, %v316
    %v318 = vpop.f32.mrf.mxu0
    %v319 = vadd.f32 %v95, %v318
    %320 = vmatprep.mubr.bf16.mxu0 0
    %321 = vmatmul.mubr.bf16.gmra.mxu0 %v50
    %v322 = vpop.f32.mrf.mxu0
    %v323 = vadd.f32 %v91, %v322
    %v324 = vpop.f32.mrf.mxu0
    %v325 = vadd.f32 %v95, %v324
    %v326 = vpop.f32.mrf.mxu0
    %v327 = vadd.f32 %v91, %v326
    %v328 = vpop.f32.mrf.mxu0
    %v329 = vadd.f32 %v95, %v328
    %330 = vmatprep.mubr.bf16.mxu0 0
    %331 = vmatmul.mubr.bf16.gmra.mxu0 %v51
    %v332 = vpop.f32.mrf.mxu0
    %v333 = vadd.f32 %v91, %v332
    %v334 = vpop.f32.mrf.mxu0
    %v335 = vadd.f32 %v95, %v334
    %v336 = vpop.f32.mrf.mxu0
    %v337 = vadd.f32 %v91, %v336
    %v338 = vpop.f32.mrf.mxu0
    %v339 = vadd.f32 %v95, %v338
    %340 = vmatprep.mubr.bf16.mxu0 0
    %341 = vmatmul.mubr.bf16.gmra.mxu0 %v52
    %v342 = vpop.f32.mrf.mxu0
    %v343 = vadd.f32 %v91, %v342
    %v344 = vpop.f32.mrf.mxu0
    %v345 = vadd.f32 %v95, %v344
    %v346 = vpop.f32.mrf.mxu0
    %v347 = vadd.f32 %v91, %v346
    %v348 = vpop.f32.mrf.mxu0
    %v349 = vadd.f32 %v95, %v348
    %350 = vmatprep.mubr.bf16.mxu0 0
    %351 = vmatmul.mubr.bf16.gmra.mxu0 %v53
    %v352 = vpop.f32.mrf.mxu0
    %v353 = vadd.f32 %v91, %v352
    %v354 = vpop.f32.mrf.mxu0
    %v355 = vadd.f32 %v95, %v354
    %v356 = vpop.f32.mrf.mxu0
    %v357 = vadd.f32 %v91, %v356
    %v358 = vpop.f32.mrf.mxu0
    %v359 = vadd.f32 %v95, %v358
    %360 = vdwg.mxu0
    %361 = vmatprep.subr.bf16.mxu0 %v235
    %362 = vmatpush1.bf16.msra.mxu0 %v234
    %363 = vmatprep.subr.bf16.mxu0 %v231
    %364 = vmatpush1.bf16.msra.mxu0 %v230
    %365 = vmatprep.subr.bf16.mxu0 %v227
    %366 = vmatpush1.bf16.msra.mxu0 %v226
    %367 = vmatprep.subr.bf16.mxu0 %v223
    %368 = vmatpush1.bf16.msra.mxu0 %v222
    %369 = vmatprep.subr.bf16.mxu0 %v219
    %370 = vmatpush1.bf16.msra.mxu0 %v218
    %371 = vmatprep.subr.bf16.mxu0 %v215
    %372 = vmatpush1.bf16.msra.mxu0 %v214
    %373 = vmatprep.subr.bf16.mxu0 %v211
    %374 = vmatpush1.bf16.msra.mxu0 %v210
    %375 = vmatprep.subr.bf16.mxu0 %v207
    %376 = vmatpush1.bf16.msra.mxu0 %v206
    %377 = vmatprep.subr.bf16.mxu0 0
    %378 = vmatpush2.bf16.msra.mxu0 0
    %379 = vmatprep.subr.bf16.mxu0 0
    %380 = vmatpush2.bf16.msra.mxu0 0
    %381 = vmatprep.subr.bf16.mxu0 0
    %382 = vmatpush2.bf16.msra.mxu0 0
    %383 = vmatprep.subr.bf16.mxu0 0
    %384 = vmatpush2.bf16.msra.mxu0 0
    %385 = vmatprep.subr.bf16.mxu0 0
    %386 = vmatpush2.bf16.msra.mxu0 0
    %387 = vmatprep.subr.bf16.mxu0 0
    %388 = vmatpush2.bf16.msra.mxu0 0
    %389 = vmatprep.subr.bf16.mxu0 0
    %390 = vmatpush2.bf16.msra.mxu0 0
    %391 = vmatprep.subr.bf16.mxu0 0
    %392 = vmatpush2.bf16.msra.mxu0 0
    %393 = vmatprep.mubr.bf16.mxu0 0
    %394 = vmatmul.mubr.bf16.gmra.mxu0 %v48
    %v395 = vpop.f32.mrf.mxu0
    %v396 = vadd.f32 %v99, %v395
    %v397 = vpop.f32.mrf.mxu0
    %v398 = vadd.f32 %v103, %v397
    %v399 = vpop.f32.mrf.mxu0
    %v400 = vadd.f32 %v99, %v399
    %v401 = vpop.f32.mrf.mxu0
    %v402 = vadd.f32 %v103, %v401
    %403 = vmatprep.mubr.bf16.mxu0 0
    %404 = vmatmul.mubr.bf16.gmra.mxu0 %v49
    %v405 = vpop.f32.mrf.mxu0
    %v406 = vadd.f32 %v99, %v405
    %v407 = vpop.f32.mrf.mxu0
    %v408 = vadd.f32 %v103, %v407
    %v409 = vpop.f32.mrf.mxu0
    %v410 = vadd.f32 %v99, %v409
    %v411 = vpop.f32.mrf.mxu0
    %v412 = vadd.f32 %v103, %v411
    %413 = vmatprep.mubr.bf16.mxu0 0
    %414 = vmatmul.mubr.bf16.gmra.mxu0 %v50
    %v415 = vpop.f32.mrf.mxu0
    %v416 = vadd.f32 %v99, %v415
    %v417 = vpop.f32.mrf.mxu0
    %v418 = vadd.f32 %v103, %v417
    %v419 = vpop.f32.mrf.mxu0
    %v420 = vadd.f32 %v99, %v419
    %v421 = vpop.f32.mrf.mxu0
    %v422 = vadd.f32 %v103, %v421
    %423 = vmatprep.mubr.bf16.mxu0 0
    %424 = vmatmul.mubr.bf16.gmra.mxu0 %v51
    %v425 = vpop.f32.mrf.mxu0
    %v426 = vadd.f32 %v99, %v425
    %v427 = vpop.f32.mrf.mxu0
    %v428 = vadd.f32 %v103, %v427
    %v429 = vpop.f32.mrf.mxu0
    %v430 = vadd.f32 %v99, %v429
    %v431 = vpop.f32.mrf.mxu0
    %v432 = vadd.f32 %v103, %v431
    %433 = vmatprep.mubr.bf16.mxu0 0
    %434 = vmatmul.mubr.bf16.gmra.mxu0 %v52
    %v435 = vpop.f32.mrf.mxu0
    %v436 = vadd.f32 %v99, %v435
    %v437 = vpop.f32.mrf.mxu0
    %v438 = vadd.f32 %v103, %v437
    %v439 = vpop.f32.mrf.mxu0
    %v440 = vadd.f32 %v99, %v439
    %v441 = vpop.f32.mrf.mxu0
    %v442 = vadd.f32 %v103, %v441
    %443 = vmatprep.mubr.bf16.mxu0 0
    %444 = vmatmul.mubr.bf16.gmra.mxu0 %v53
    %v445 = vpop.f32.mrf.mxu0
    %v446 = vadd.f32 %v99, %v445
    %v447 = vpop.f32.mrf.mxu0
    %v448 = vadd.f32 %v103, %v447
    %v449 = vpop.f32.mrf.mxu0
    %v450 = vadd.f32 %v99, %v449
    %v451 = vpop.f32.mrf.mxu0
    %v452 = vadd.f32 %v103, %v451
    %453 = vdwg.mxu0
    %v454 = vmax.f32 %v303, 0.0
    %v455 = vmax.f32 %v305, 0.0
    %v456 = vmax.f32 %v396, 0.0
    %v457 = vmax.f32 %v398, 0.0
    %v458 = vmax.f32 %v307, 0.0
    %v459 = vmax.f32 %v309, 0.0
    %v460 = vmax.f32 %v400, 0.0
    %v461 = vmax.f32 %v402, 0.0
    %v462 = vmax.f32 %v313, 0.0
    %v463 = vmax.f32 %v315, 0.0
    %v464 = vmax.f32 %v406, 0.0
    %v465 = vmax.f32 %v408, 0.0
    %v466 = vmax.f32 %v317, 0.0
    %v467 = vmax.f32 %v319, 0.0
    %v468 = vmax.f32 %v410, 0.0
    %v469 = vmax.f32 %v412, 0.0
    %v470 = vmax.f32 %v323, 0.0
    %v471 = vmax.f32 %v325, 0.0
    %v472 = vmax.f32 %v416, 0.0
    %v473 = vmax.f32 %v418, 0.0
    %v474 = vmax.f32 %v327, 0.0
    %v475 = vmax.f32 %v329, 0.0
    %v476 = vmax.f32 %v420, 0.0
    %v477 = vmax.f32 %v422, 0.0
    %v478 = vmax.f32 %v333, 0.0
    %v479 = vmax.f32 %v335, 0.0
    %v480 = vmax.f32 %v426, 0.0
    %v481 = vmax.f32 %v428, 0.0
    %v482 = vmax.f32 %v337, 0.0
    %v483 = vmax.f32 %v339, 0.0
    %v484 = vmax.f32 %v430, 0.0
    %v485 = vmax.f32 %v432, 0.0
    %v486 = vmax.f32 %v343, 0.0
    %v487 = vmax.f32 %v345, 0.0
    %v488 = vmax.f32 %v436, 0.0
    %v489 = vmax.f32 %v438, 0.0
    %v490 = vmax.f32 %v347, 0.0
    %v491 = vmax.f32 %v349, 0.0
    %v492 = vmax.f32 %v440, 0.0
    %v493 = vmax.f32 %v442, 0.0
    %v494 = vmax.f32 %v353, 0.0
    %v495 = vmax.f32 %v355, 0.0
    %v496 = vmax.f32 %v446, 0.0
    %v497 = vmax.f32 %v448, 0.0
    %v498 = vmax.f32 %v357, 0.0
    %v499 = vmax.f32 %v359, 0.0
    %v500 = vmax.f32 %v450, 0.0
    %v501 = vmax.f32 %v452, 0.0
    %v502 = vpack.c.bf16 %v458, %v454
    %v503 = vpack.c.bf16 %v459, %v455
    %v504 = vpack.c.bf16 %v460, %v456
    %v505 = vpack.c.bf16 %v461, %v457
    %v506 = vpack.c.bf16 %v466, %v462
    %v507 = vpack.c.bf16 %v467, %v463
    %v508 = vpack.c.bf16 %v468, %v464
    %v509 = vpack.c.bf16 %v469, %v465
    %v510 = vpack.c.bf16 %v474, %v470
    %v511 = vpack.c.bf16 %v475, %v471
    %v512 = vpack.c.bf16 %v476, %v472
    %v513 = vpack.c.bf16 %v477, %v473
    %v514 = vpack.c.bf16 %v482, %v478
    %v515 = vpack.c.bf16 %v483, %v479
    %v516 = vpack.c.bf16 %v484, %v480
    %v517 = vpack.c.bf16 %v485, %v481
    %v518 = vpack.c.bf16 %v490, %v486
    %v519 = vpack.c.bf16 %v491, %v487
    %v520 = vpack.c.bf16 %v492, %v488
    %v521 = vpack.c.bf16 %v493, %v489
    %v522 = vpack.c.bf16 %v498, %v494
    %v523 = vpack.c.bf16 %v499, %v495
    %v524 = vpack.c.bf16 %v500, %v496
    %v525 = vpack.c.bf16 %v501, %v497
    %v526 = vld [vmem:[%s3] sm:$0xff]
    %v527 = vld [vmem:[%s3 + $0x8] sm:$0xff]
    %v528 = vld [vmem:[%s3 + $0x10] sm:$0xff]
    %v529 = vld [vmem:[%s3 + $0x18] sm:$0xff]
    %v530 = vld [vmem:[%s3 + $0x20] sm:$0xff]
    %v531 = vld [vmem:[%s3 + $0x28] sm:$0xff]
    %v532 = vld [vmem:[%s3 + $0x30] sm:$0xff]
    %v533 = vld [vmem:[%s3 + $0x38] sm:$0xff]
    %v534 = vld [vmem:[%s3 + $0x40] sm:$0xff]
    %v535 = vld [vmem:[%s3 + $0x48] sm:$0xff]
    %v536 = vld [vmem:[%s3 + $0x50] sm:$0xff]
    %v537 = vld [vmem:[%s3 + $0x58] sm:$0xff]
    %v538 = vld [vmem:[%s3 + $0x60] sm:$0xff]
    %v539 = vld [vmem:[%s3 + $0x68] sm:$0xff]
    %v540 = vld [vmem:[%s3 + $0x70] sm:$0xff]
    %v541 = vld [vmem:[%s3 + $0x78] sm:$0xff]
    %v542 = vld [vmem:[%s3 + $0x80] sm:$0xff]
    %v543 = vld [vmem:[%s3 + $0x88] sm:$0xff]
    %v544 = vld [vmem:[%s3 + $0x90] sm:$0xff]
    %v545 = vld [vmem:[%s3 + $0x98] sm:$0xff]
    %v546 = vld [vmem:[%s3 + $0xa0] sm:$0xff]
    %v547 = vld [vmem:[%s3 + $0xa8] sm:$0xff]
    %v548 = vld [vmem:[%s3 + $0xb0] sm:$0xff]
    %v549 = vld [vmem:[%s3 + $0xb8] sm:$0xff]
    %v550 = vld [vmem:[%s3 + $0xc0] sm:$0xff]
    %v551 = vld [vmem:[%s3 + $0xc8] sm:$0xff]
    %v552 = vld [vmem:[%s3 + $0xd0] sm:$0xff]
    %v553 = vld [vmem:[%s3 + $0xd8] sm:$0xff]
    %v554 = vld [vmem:[%s3 + $0xe0] sm:$0xff]
    %v555 = vld [vmem:[%s3 + $0xe8] sm:$0xff]
    %v556 = vld [vmem:[%s3 + $0xf0] sm:$0xff]
    %v557 = vld [vmem:[%s3 + $0xf8] sm:$0xff]
    %v558 = vld [vmem:[%s3 + $0x100] sm:$0xff]
    %v559 = vld [vmem:[%s3 + $0x108] sm:$0xff]
    %v560 = vld [vmem:[%s3 + $0x110] sm:$0xff]
    %v561 = vld [vmem:[%s3 + $0x118] sm:$0xff]
    %v562 = vld [vmem:[%s3 + $0x120] sm:$0xff]
    %v563 = vld [vmem:[%s3 + $0x128] sm:$0xff]
    %v564 = vld [vmem:[%s3 + $0x130] sm:$0xff]
    %v565 = vld [vmem:[%s3 + $0x138] sm:$0xff]
    %v566 = vld [vmem:[%s3 + $0x140] sm:$0xff]
    %v567 = vld [vmem:[%s3 + $0x148] sm:$0xff]
    %v568 = vld [vmem:[%s3 + $0x150] sm:$0xff]
    %v569 = vld [vmem:[%s3 + $0x158] sm:$0xff]
    %v570 = vld [vmem:[%s3 + $0x160] sm:$0xff]
    %v571 = vld [vmem:[%s3 + $0x168] sm:$0xff]
    %v572 = vld [vmem:[%s3 + $0x170] sm:$0xff]
    %v573 = vld [vmem:[%s3 + $0x178] sm:$0xff]
    %v574 = vld [vmem:[%s3 + $0x180] sm:$0xff]
    %v575 = vld [vmem:[%s3 + $0x188] sm:$0xff]
    %v576 = vld [vmem:[%s3 + $0x190] sm:$0xff]
    %v577 = vld [vmem:[%s3 + $0x198] sm:$0xff]
    %v578 = vld [vmem:[%s3 + $0x1a0] sm:$0xff]
    %v579 = vld [vmem:[%s3 + $0x1a8] sm:$0xff]
    %v580 = vld [vmem:[%s3 + $0x1b0] sm:$0xff]
    %v581 = vld [vmem:[%s3 + $0x1b8] sm:$0xff]
    %v582 = vld [vmem:[%s3 + $0x1c0] sm:$0xff]
    %v583 = vld [vmem:[%s3 + $0x1c8] sm:$0xff]
    %v584 = vld [vmem:[%s3 + $0x1d0] sm:$0xff]
    %v585 = vld [vmem:[%s3 + $0x1d8] sm:$0xff]
    %v586 = vld [vmem:[%s3 + $0x1e0] sm:$0xff]
    %v587 = vld [vmem:[%s3 + $0x1e8] sm:$0xff]
    %v588 = vld [vmem:[%s3 + $0x1f0] sm:$0xff]
    %v589 = vld [vmem:[%s3 + $0x1f8] sm:$0xff]
    %v590 = vld [vmem:[%s4] sm:$0x3]
    %v592 = vlaneseq
    %v593 = vshrl.u32 %v592, 7
    %v594 = vsub.s32 0, %v593
    %v595 = vrot.slane %v590, %v594
    %v596 = vlaneseq
    %v597 = vshrl.u32 %v596, 7
    %v598 = vsub.s32 1, %v597
    %v599 = vrot.slane %v590, %v598
    %v666 = vunpack.c.l.b16 %v526
    %v667 = vunpack.c.h.b16 %v526
    %v668 = vunpack.c.l.b16 %v527
    %v669 = vunpack.c.h.b16 %v527
    %v670 = vunpack.c.l.b16 %v528
    %v671 = vunpack.c.h.b16 %v528
    %v672 = vunpack.c.l.b16 %v529
    %v673 = vunpack.c.h.b16 %v529
    %v674 = vunpack.c.l.b16 %v530
    %v675 = vunpack.c.h.b16 %v530
    %v676 = vunpack.c.l.b16 %v531
    %v677 = vunpack.c.h.b16 %v531
    %v678 = vunpack.c.l.b16 %v532
    %v679 = vunpack.c.h.b16 %v532
    %v680 = vunpack.c.l.b16 %v533
    %v681 = vunpack.c.h.b16 %v533
    %v682 = vunpack.c.l.b16 %v534
    %v683 = vunpack.c.h.b16 %v534
    %v684 = vunpack.c.l.b16 %v535
    %v685 = vunpack.c.h.b16 %v535
    %v686 = vunpack.c.l.b16 %v536
    %v687 = vunpack.c.h.b16 %v536
    %v688 = vunpack.c.l.b16 %v537
    %v689 = vunpack.c.h.b16 %v537
    %v690 = vunpack.c.l.b16 %v538
    %v691 = vunpack.c.h.b16 %v538
    %v692 = vunpack.c.l.b16 %v539
    %v693 = vunpack.c.h.b16 %v539
    %v694 = vunpack.c.l.b16 %v540
    %v695 = vunpack.c.h.b16 %v540
    %v696 = vunpack.c.l.b16 %v541
    %v697 = vunpack.c.h.b16 %v541
    %v698 = vunpack.c.l.b16 %v542
    %v699 = vunpack.c.h.b16 %v542
    %v700 = vunpack.c.l.b16 %v543
    %v701 = vunpack.c.h.b16 %v543
    %v702 = vunpack.c.l.b16 %v544
    %v703 = vunpack.c.h.b16 %v544
    %v704 = vunpack.c.l.b16 %v545
    %v705 = vunpack.c.h.b16 %v545
    %v706 = vunpack.c.l.b16 %v546
    %v707 = vunpack.c.h.b16 %v546
    %v708 = vunpack.c.l.b16 %v547
    %v709 = vunpack.c.h.b16 %v547
    %v710 = vunpack.c.l.b16 %v548
    %v711 = vunpack.c.h.b16 %v548
    %v712 = vunpack.c.l.b16 %v549
    %v713 = vunpack.c.h.b16 %v549
    %v714 = vunpack.c.l.b16 %v550
    %v715 = vunpack.c.h.b16 %v550
    %v716 = vunpack.c.l.b16 %v551
    %v717 = vunpack.c.h.b16 %v551
    %v718 = vunpack.c.l.b16 %v552
    %v719 = vunpack.c.h.b16 %v552
    %v720 = vunpack.c.l.b16 %v553
    %v721 = vunpack.c.h.b16 %v553
    %v722 = vunpack.c.l.b16 %v554
    %v723 = vunpack.c.h.b16 %v554
    %v724 = vunpack.c.l.b16 %v555
    %v725 = vunpack.c.h.b16 %v555
    %v726 = vunpack.c.l.b16 %v556
    %v727 = vunpack.c.h.b16 %v556
    %v728 = vunpack.c.l.b16 %v557
    %v729 = vunpack.c.h.b16 %v557
    %v730 = vunpack.c.l.b16 %v558
    %v731 = vunpack.c.h.b16 %v558
    %v732 = vunpack.c.l.b16 %v559
    %v733 = vunpack.c.h.b16 %v559
    %v734 = vunpack.c.l.b16 %v560
    %v735 = vunpack.c.h.b16 %v560
    %v736 = vunpack.c.l.b16 %v561
    %v737 = vunpack.c.h.b16 %v561
    %v738 = vunpack.c.l.b16 %v562
    %v739 = vunpack.c.h.b16 %v562
    %v740 = vunpack.c.l.b16 %v563
    %v741 = vunpack.c.h.b16 %v563
    %v742 = vunpack.c.l.b16 %v564
    %v743 = vunpack.c.h.b16 %v564
    %v744 = vunpack.c.l.b16 %v565
    %v745 = vunpack.c.h.b16 %v565
    %v746 = vunpack.c.l.b16 %v566
    %v747 = vunpack.c.h.b16 %v566
    %v748 = vunpack.c.l.b16 %v567
    %v749 = vunpack.c.h.b16 %v567
    %v750 = vunpack.c.l.b16 %v568
    %v751 = vunpack.c.h.b16 %v568
    %v752 = vunpack.c.l.b16 %v569
    %v753 = vunpack.c.h.b16 %v569
    %v754 = vunpack.c.l.b16 %v570
    %v755 = vunpack.c.h.b16 %v570
    %v756 = vunpack.c.l.b16 %v571
    %v757 = vunpack.c.h.b16 %v571
    %v758 = vunpack.c.l.b16 %v572
    %v759 = vunpack.c.h.b16 %v572
    %v760 = vunpack.c.l.b16 %v573
    %v761 = vunpack.c.h.b16 %v573
    %v762 = vunpack.c.l.b16 %v574
    %v763 = vunpack.c.h.b16 %v574
    %v764 = vunpack.c.l.b16 %v575
    %v765 = vunpack.c.h.b16 %v575
    %v766 = vunpack.c.l.b16 %v576
    %v767 = vunpack.c.h.b16 %v576
    %v768 = vunpack.c.l.b16 %v577
    %v769 = vunpack.c.h.b16 %v577
    %v770 = vunpack.c.l.b16 %v578
    %v771 = vunpack.c.h.b16 %v578
    %v772 = vunpack.c.l.b16 %v579
    %v773 = vunpack.c.h.b16 %v579
    %v774 = vunpack.c.l.b16 %v580
    %v775 = vunpack.c.h.b16 %v580
    %v776 = vunpack.c.l.b16 %v581
    %v777 = vunpack.c.h.b16 %v581
    %v778 = vunpack.c.l.b16 %v582
    %v779 = vunpack.c.h.b16 %v582
    %v780 = vunpack.c.l.b16 %v583
    %v781 = vunpack.c.h.b16 %v583
    %v782 = vunpack.c.l.b16 %v584
    %v783 = vunpack.c.h.b16 %v584
    %v784 = vunpack.c.l.b16 %v585
    %v785 = vunpack.c.h.b16 %v585
    %v786 = vunpack.c.l.b16 %v586
    %v787 = vunpack.c.h.b16 %v586
    %v788 = vunpack.c.l.b16 %v587
    %v789 = vunpack.c.h.b16 %v587
    %v790 = vunpack.c.l.b16 %v588
    %v791 = vunpack.c.h.b16 %v588
    %v792 = vunpack.c.l.b16 %v589
    %v793 = vunpack.c.h.b16 %v589
    %v794 = vpack.c.b16 %v668, %v666
    %v795 = vpack.c.b16 %v669, %v667
    %v796 = vpack.c.b16 %v672, %v670
    %v797 = vpack.c.b16 %v673, %v671
    %v798 = vpack.c.b16 %v676, %v674
    %v799 = vpack.c.b16 %v677, %v675
    %v800 = vpack.c.b16 %v680, %v678
    %v801 = vpack.c.b16 %v681, %v679
    %v802 = vpack.c.b16 %v684, %v682
    %v803 = vpack.c.b16 %v685, %v683
    %v804 = vpack.c.b16 %v688, %v686
    %v805 = vpack.c.b16 %v689, %v687
    %v806 = vpack.c.b16 %v692, %v690
    %v807 = vpack.c.b16 %v693, %v691
    %v808 = vpack.c.b16 %v696, %v694
    %v809 = vpack.c.b16 %v697, %v695
    %v810 = vpack.c.b16 %v700, %v698
    %v811 = vpack.c.b16 %v701, %v699
    %v812 = vpack.c.b16 %v704, %v702
    %v813 = vpack.c.b16 %v705, %v703
    %v814 = vpack.c.b16 %v708, %v706
    %v815 = vpack.c.b16 %v709, %v707
    %v816 = vpack.c.b16 %v712, %v710
    %v817 = vpack.c.b16 %v713, %v711
    %v818 = vpack.c.b16 %v716, %v714
    %v819 = vpack.c.b16 %v717, %v715
    %v820 = vpack.c.b16 %v720, %v718
    %v821 = vpack.c.b16 %v721, %v719
    %v822 = vpack.c.b16 %v724, %v722
    %v823 = vpack.c.b16 %v725, %v723
    %v824 = vpack.c.b16 %v728, %v726
    %v825 = vpack.c.b16 %v729, %v727
    %v826 = vpack.c.b16 %v732, %v730
    %v827 = vpack.c.b16 %v733, %v731
    %v828 = vpack.c.b16 %v736, %v734
    %v829 = vpack.c.b16 %v737, %v735
    %v830 = vpack.c.b16 %v740, %v738
    %v831 = vpack.c.b16 %v741, %v739
    %v832 = vpack.c.b16 %v744, %v742
    %v833 = vpack.c.b16 %v745, %v743
    %v834 = vpack.c.b16 %v748, %v746
    %v835 = vpack.c.b16 %v749, %v747
    %v836 = vpack.c.b16 %v752, %v750
    %v837 = vpack.c.b16 %v753, %v751
    %v838 = vpack.c.b16 %v756, %v754
    %v839 = vpack.c.b16 %v757, %v755
    %v840 = vpack.c.b16 %v760, %v758
    %v841 = vpack.c.b16 %v761, %v759
    %v842 = vpack.c.b16 %v764, %v762
    %v843 = vpack.c.b16 %v765, %v763
    %v844 = vpack.c.b16 %v768, %v766
    %v845 = vpack.c.b16 %v769, %v767
    %v846 = vpack.c.b16 %v772, %v770
    %v847 = vpack.c.b16 %v773, %v771
    %v848 = vpack.c.b16 %v776, %v774
    %v849 = vpack.c.b16 %v777, %v775
    %v850 = vpack.c.b16 %v780, %v778
    %v851 = vpack.c.b16 %v781, %v779
    %v852 = vpack.c.b16 %v784, %v782
    %v853 = vpack.c.b16 %v785, %v783
    %v854 = vpack.c.b16 %v788, %v786
    %v855 = vpack.c.b16 %v789, %v787
    %v856 = vpack.c.b16 %v792, %v790
    %v857 = vpack.c.b16 %v793, %v791
    %922 = vmatprep.subr.bf16.mxu0 %v809
    %923 = vmatpush1.bf16.msra.mxu0 %v808
    %924 = vmatprep.subr.bf16.mxu0 %v807
    %925 = vmatpush1.bf16.msra.mxu0 %v806
    %926 = vmatprep.subr.bf16.mxu0 %v805
    %927 = vmatpush1.bf16.msra.mxu0 %v804
    %928 = vmatprep.subr.bf16.mxu0 %v803
    %929 = vmatpush1.bf16.msra.mxu0 %v802
    %930 = vmatprep.subr.bf16.mxu0 %v801
    %931 = vmatpush1.bf16.msra.mxu0 %v800
    %932 = vmatprep.subr.bf16.mxu0 %v799
    %933 = vmatpush1.bf16.msra.mxu0 %v798
    %934 = vmatprep.subr.bf16.mxu0 %v797
    %935 = vmatpush1.bf16.msra.mxu0 %v796
    %936 = vmatprep.subr.bf16.mxu0 %v795
    %937 = vmatpush1.bf16.msra.mxu0 %v794
    %938 = vmatprep.subr.bf16.mxu0 %v825
    %939 = vmatpush2.bf16.msra.mxu0 %v824
    %940 = vmatprep.subr.bf16.mxu0 %v823
    %941 = vmatpush2.bf16.msra.mxu0 %v822
    %942 = vmatprep.subr.bf16.mxu0 %v821
    %943 = vmatpush2.bf16.msra.mxu0 %v820
    %944 = vmatprep.subr.bf16.mxu0 %v819
    %945 = vmatpush2.bf16.msra.mxu0 %v818
    %946 = vmatprep.subr.bf16.mxu0 %v817
    %947 = vmatpush2.bf16.msra.mxu0 %v816
    %948 = vmatprep.subr.bf16.mxu0 %v815
    %949 = vmatpush2.bf16.msra.mxu0 %v814
    %950 = vmatprep.subr.bf16.mxu0 %v813
    %951 = vmatpush2.bf16.msra.mxu0 %v812
    %952 = vmatprep.subr.bf16.mxu0 %v811
    %953 = vmatpush2.bf16.msra.mxu0 %v810
    %954 = vmatprep.mubr.bf16.mxu0 %v503
    %955 = vmatmul.mubr.bf16.gmra.mxu0 %v502
    %v956 = vpop.f32.mrf.mxu0
    %v957 = vadd.f32 %v595, %v956
    %v958 = vpop.f32.mrf.mxu0
    %v959 = vadd.f32 %v599, %v958
    %v960 = vpop.f32.mrf.mxu0
    %v961 = vadd.f32 %v595, %v960
    %v962 = vpop.f32.mrf.mxu0
    %v963 = vadd.f32 %v599, %v962
    %964 = vmatprep.mubr.bf16.mxu0 %v507
    %965 = vmatmul.mubr.bf16.gmra.mxu0 %v506
    %v966 = vpop.f32.mrf.mxu0
    %v967 = vadd.f32 %v595, %v966
    %v968 = vpop.f32.mrf.mxu0
    %v969 = vadd.f32 %v599, %v968
    %v970 = vpop.f32.mrf.mxu0
    %v971 = vadd.f32 %v595, %v970
    %v972 = vpop.f32.mrf.mxu0
    %v973 = vadd.f32 %v599, %v972
    %974 = vmatprep.mubr.bf16.mxu0 %v511
    %975 = vmatmul.mubr.bf16.gmra.mxu0 %v510
    %v976 = vpop.f32.mrf.mxu0
    %v977 = vadd.f32 %v595, %v976
    %v978 = vpop.f32.mrf.mxu0
    %v979 = vadd.f32 %v599, %v978
    %v980 = vpop.f32.mrf.mxu0
    %v981 = vadd.f32 %v595, %v980
    %v982 = vpop.f32.mrf.mxu0
    %v983 = vadd.f32 %v599, %v982
    %984 = vmatprep.mubr.bf16.mxu0 %v515
    %985 = vmatmul.mubr.bf16.gmra.mxu0 %v514
    %v986 = vpop.f32.mrf.mxu0
    %v987 = vadd.f32 %v595, %v986
    %v988 = vpop.f32.mrf.mxu0
    %v989 = vadd.f32 %v599, %v988
    %v990 = vpop.f32.mrf.mxu0
    %v991 = vadd.f32 %v595, %v990
    %v992 = vpop.f32.mrf.mxu0
    %v993 = vadd.f32 %v599, %v992
    %994 = vmatprep.mubr.bf16.mxu0 %v519
    %995 = vmatmul.mubr.bf16.gmra.mxu0 %v518
    %v996 = vpop.f32.mrf.mxu0
    %v997 = vadd.f32 %v595, %v996
    %v998 = vpop.f32.mrf.mxu0
    %v999 = vadd.f32 %v599, %v998
    %v1000 = vpop.f32.mrf.mxu0
    %v1001 = vadd.f32 %v595, %v1000
    %v1002 = vpop.f32.mrf.mxu0
    %v1003 = vadd.f32 %v599, %v1002
    %1004 = vmatprep.mubr.bf16.mxu0 %v523
    %1005 = vmatmul.mubr.bf16.gmra.mxu0 %v522
    %v1006 = vpop.f32.mrf.mxu0
    %v1007 = vadd.f32 %v595, %v1006
    %v1008 = vpop.f32.mrf.mxu0
    %v1009 = vadd.f32 %v599, %v1008
    %v1010 = vpop.f32.mrf.mxu0
    %v1011 = vadd.f32 %v595, %v1010
    %v1012 = vpop.f32.mrf.mxu0
    %v1013 = vadd.f32 %v599, %v1012
    %1014 = vdwg.mxu0
    %1015 = vmatprep.subr.bf16.mxu0 %v841
    %1016 = vmatpush1.bf16.msra.mxu0 %v840
    %1017 = vmatprep.subr.bf16.mxu0 %v839
    %1018 = vmatpush1.bf16.msra.mxu0 %v838
    %1019 = vmatprep.subr.bf16.mxu0 %v837
    %1020 = vmatpush1.bf16.msra.mxu0 %v836
    %1021 = vmatprep.subr.bf16.mxu0 %v835
    %1022 = vmatpush1.bf16.msra.mxu0 %v834
    %1023 = vmatprep.subr.bf16.mxu0 %v833
    %1024 = vmatpush1.bf16.msra.mxu0 %v832
    %1025 = vmatprep.subr.bf16.mxu0 %v831
    %1026 = vmatpush1.bf16.msra.mxu0 %v830
    %1027 = vmatprep.subr.bf16.mxu0 %v829
    %1028 = vmatpush1.bf16.msra.mxu0 %v828
    %1029 = vmatprep.subr.bf16.mxu0 %v827
    %1030 = vmatpush1.bf16.msra.mxu0 %v826
    %1031 = vmatprep.subr.bf16.mxu0 %v857
    %1032 = vmatpush2.bf16.msra.mxu0 %v856
    %1033 = vmatprep.subr.bf16.mxu0 %v855
    %1034 = vmatpush2.bf16.msra.mxu0 %v854
    %1035 = vmatprep.subr.bf16.mxu0 %v853
    %1036 = vmatpush2.bf16.msra.mxu0 %v852
    %1037 = vmatprep.subr.bf16.mxu0 %v851
    %1038 = vmatpush2.bf16.msra.mxu0 %v850
    %1039 = vmatprep.subr.bf16.mxu0 %v849
    %1040 = vmatpush2.bf16.msra.mxu0 %v848
    %1041 = vmatprep.subr.bf16.mxu0 %v847
    %1042 = vmatpush2.bf16.msra.mxu0 %v846
    %1043 = vmatprep.subr.bf16.mxu0 %v845
    %1044 = vmatpush2.bf16.msra.mxu0 %v844
    %1045 = vmatprep.subr.bf16.mxu0 %v843
    %1046 = vmatpush2.bf16.msra.mxu0 %v842
    %1047 = vmatprep.mubr.bf16.mxu0 %v505
    %1048 = vmatmul.mubr.bf16.gmra.mxu0 %v504
    %v1049 = vpop.f32.mrf.mxu0
    %v1050 = vadd.f32 %v957, %v1049
    %v1051 = vpop.f32.mrf.mxu0
    %v1052 = vadd.f32 %v959, %v1051
    %v1053 = vpop.f32.mrf.mxu0
    %v1054 = vadd.f32 %v961, %v1053
    %v1055 = vpop.f32.mrf.mxu0
    %v1056 = vadd.f32 %v963, %v1055
    %1057 = vmatprep.mubr.bf16.mxu0 %v509
    %1058 = vmatmul.mubr.bf16.gmra.mxu0 %v508
    %v1059 = vpop.f32.mrf.mxu0
    %v1060 = vadd.f32 %v967, %v1059
    %v1061 = vpop.f32.mrf.mxu0
    %v1062 = vadd.f32 %v969, %v1061
    %v1063 = vpop.f32.mrf.mxu0
    %v1064 = vadd.f32 %v971, %v1063
    %v1065 = vpop.f32.mrf.mxu0
    %v1066 = vadd.f32 %v973, %v1065
    %1067 = vmatprep.mubr.bf16.mxu0 %v513
    %1068 = vmatmul.mubr.bf16.gmra.mxu0 %v512
    %v1069 = vpop.f32.mrf.mxu0
    %v1070 = vadd.f32 %v977, %v1069
    %v1071 = vpop.f32.mrf.mxu0
    %v1072 = vadd.f32 %v979, %v1071
    %v1073 = vpop.f32.mrf.mxu0
    %v1074 = vadd.f32 %v981, %v1073
    %v1075 = vpop.f32.mrf.mxu0
    %v1076 = vadd.f32 %v983, %v1075
    %1077 = vmatprep.mubr.bf16.mxu0 %v517
    %1078 = vmatmul.mubr.bf16.gmra.mxu0 %v516
    %v1079 = vpop.f32.mrf.mxu0
    %v1080 = vadd.f32 %v987, %v1079
    %v1081 = vpop.f32.mrf.mxu0
    %v1082 = vadd.f32 %v989, %v1081
    %v1083 = vpop.f32.mrf.mxu0
    %v1084 = vadd.f32 %v991, %v1083
    %v1085 = vpop.f32.mrf.mxu0
    %v1086 = vadd.f32 %v993, %v1085
    %1087 = vmatprep.mubr.bf16.mxu0 %v521
    %1088 = vmatmul.mubr.bf16.gmra.mxu0 %v520
    %v1089 = vpop.f32.mrf.mxu0
    %v1090 = vadd.f32 %v997, %v1089
    %v1091 = vpop.f32.mrf.mxu0
    %v1092 = vadd.f32 %v999, %v1091
    %v1093 = vpop.f32.mrf.mxu0
    %v1094 = vadd.f32 %v1001, %v1093
    %v1095 = vpop.f32.mrf.mxu0
    %v1096 = vadd.f32 %v1003, %v1095
    %1097 = vmatprep.mubr.bf16.mxu0 %v525
    %1098 = vmatmul.mubr.bf16.gmra.mxu0 %v524
    %v1099 = vpop.f32.mrf.mxu0
    %v1100 = vadd.f32 %v1007, %v1099
    %v1101 = vpop.f32.mrf.mxu0
    %v1102 = vadd.f32 %v1009, %v1101
    %v1103 = vpop.f32.mrf.mxu0
    %v1104 = vadd.f32 %v1011, %v1103
    %v1105 = vpop.f32.mrf.mxu0
    %v1106 = vadd.f32 %v1013, %v1105
    %1107 = vdwg.mxu0
    %v1108 = vmax.f32 %v1050, 0.0
    %v1109 = vmax.f32 %v1052, 0.0
    %v1110 = vmax.f32 %v1054, 0.0
    %v1111 = vmax.f32 %v1056, 0.0
    %v1112 = vmax.f32 %v1060, 0.0
    %v1113 = vmax.f32 %v1062, 0.0
    %v1114 = vmax.f32 %v1064, 0.0
    %v1115 = vmax.f32 %v1066, 0.0
    %v1116 = vmax.f32 %v1070, 0.0
    %v1117 = vmax.f32 %v1072, 0.0
    %v1118 = vmax.f32 %v1074, 0.0
    %v1119 = vmax.f32 %v1076, 0.0
    %v1120 = vmax.f32 %v1080, 0.0
    %v1121 = vmax.f32 %v1082, 0.0
    %v1122 = vmax.f32 %v1084, 0.0
    %v1123 = vmax.f32 %v1086, 0.0
    %v1124 = vmax.f32 %v1090, 0.0
    %v1125 = vmax.f32 %v1092, 0.0
    %v1126 = vmax.f32 %v1094, 0.0
    %v1127 = vmax.f32 %v1096, 0.0
    %v1128 = vmax.f32 %v1100, 0.0
    %v1129 = vmax.f32 %v1102, 0.0
    %v1130 = vmax.f32 %v1104, 0.0
    %v1131 = vmax.f32 %v1106, 0.0
    %v1132 = vpack.c.bf16 %v1110, %v1108
    %v1133 = vpack.c.bf16 %v1111, %v1109
    %v1134 = vpack.c.bf16 %v1114, %v1112
    %v1135 = vpack.c.bf16 %v1115, %v1113
    %v1136 = vpack.c.bf16 %v1118, %v1116
    %v1137 = vpack.c.bf16 %v1119, %v1117
    %v1138 = vpack.c.bf16 %v1122, %v1120
    %v1139 = vpack.c.bf16 %v1123, %v1121
    %v1140 = vpack.c.bf16 %v1126, %v1124
    %v1141 = vpack.c.bf16 %v1127, %v1125
    %v1142 = vpack.c.bf16 %v1130, %v1128
    %v1143 = vpack.c.bf16 %v1131, %v1129
    %v1144 = vld [vmem:[%s5] sm:$0xf]
    %v1145 = vld [vmem:[%s5 + $0x4] sm:$0xf]
    %v1146 = vld [vmem:[%s5 + $0x8] sm:$0xf]
    %v1147 = vld [vmem:[%s5 + $0xc] sm:$0xf]
    %v1148 = vld [vmem:[%s5 + $0x10] sm:$0xf]
    %v1149 = vld [vmem:[%s5 + $0x14] sm:$0xf]
    %v1150 = vld [vmem:[%s5 + $0x18] sm:$0xf]
    %v1151 = vld [vmem:[%s5 + $0x1c] sm:$0xf]
    %v1152 = vld [vmem:[%s5 + $0x20] sm:$0xf]
    %v1153 = vld [vmem:[%s5 + $0x24] sm:$0xf]
    %v1154 = vld [vmem:[%s5 + $0x28] sm:$0xf]
    %v1155 = vld [vmem:[%s5 + $0x2c] sm:$0xf]
    %v1156 = vld [vmem:[%s5 + $0x30] sm:$0xf]
    %v1157 = vld [vmem:[%s5 + $0x34] sm:$0xf]
    %v1158 = vld [vmem:[%s5 + $0x38] sm:$0xf]
    %v1159 = vld [vmem:[%s5 + $0x3c] sm:$0xf]
    %v1160 = vld [vmem:[%s5 + $0x40] sm:$0xf]
    %v1161 = vld [vmem:[%s5 + $0x44] sm:$0xf]
    %v1162 = vld [vmem:[%s5 + $0x48] sm:$0xf]
    %v1163 = vld [vmem:[%s5 + $0x4c] sm:$0xf]
    %v1164 = vld [vmem:[%s5 + $0x50] sm:$0xf]
    %v1165 = vld [vmem:[%s5 + $0x54] sm:$0xf]
    %v1166 = vld [vmem:[%s5 + $0x58] sm:$0xf]
    %v1167 = vld [vmem:[%s5 + $0x5c] sm:$0xf]
    %v1168 = vld [vmem:[%s5 + $0x60] sm:$0xf]
    %v1169 = vld [vmem:[%s5 + $0x64] sm:$0xf]
    %v1170 = vld [vmem:[%s5 + $0x68] sm:$0xf]
    %v1171 = vld [vmem:[%s5 + $0x6c] sm:$0xf]
    %v1172 = vld [vmem:[%s5 + $0x70] sm:$0xf]
    %v1173 = vld [vmem:[%s5 + $0x74] sm:$0xf]
    %v1174 = vld [vmem:[%s5 + $0x78] sm:$0xf]
    %v1175 = vld [vmem:[%s5 + $0x7c] sm:$0xf]
    %v1176 = vld [vmem:[%s6] sm:$0x1]
    %v1178 = vlaneseq
    %v1179 = vshrl.u32 %v1178, 7
    %v1180 = vsub.s32 0, %v1179
    %v1181 = vrot.slane %v1176, %v1180
    %v1215 = vunpack.c.l.b16 %v1144
    %v1216 = vunpack.c.l.b16 %v1145
    %v1217 = vunpack.c.l.b16 %v1146
    %v1218 = vunpack.c.l.b16 %v1147
    %v1219 = vunpack.c.l.b16 %v1148
    %v1220 = vunpack.c.l.b16 %v1149
    %v1221 = vunpack.c.l.b16 %v1150
    %v1222 = vunpack.c.l.b16 %v1151
    %v1223 = vunpack.c.l.b16 %v1152
    %v1224 = vunpack.c.l.b16 %v1153
    %v1225 = vunpack.c.l.b16 %v1154
    %v1226 = vunpack.c.l.b16 %v1155
    %v1227 = vunpack.c.l.b16 %v1156
    %v1228 = vunpack.c.l.b16 %v1157
    %v1229 = vunpack.c.l.b16 %v1158
    %v1230 = vunpack.c.l.b16 %v1159
    %v1231 = vunpack.c.l.b16 %v1160
    %v1232 = vunpack.c.l.b16 %v1161
    %v1233 = vunpack.c.l.b16 %v1162
    %v1234 = vunpack.c.l.b16 %v1163
    %v1235 = vunpack.c.l.b16 %v1164
    %v1236 = vunpack.c.l.b16 %v1165
    %v1237 = vunpack.c.l.b16 %v1166
    %v1238 = vunpack.c.l.b16 %v1167
    %v1239 = vunpack.c.l.b16 %v1168
    %v1240 = vunpack.c.l.b16 %v1169
    %v1241 = vunpack.c.l.b16 %v1170
    %v1242 = vunpack.c.l.b16 %v1171
    %v1243 = vunpack.c.l.b16 %v1172
    %v1244 = vunpack.c.l.b16 %v1173
    %v1245 = vunpack.c.l.b16 %v1174
    %v1246 = vunpack.c.l.b16 %v1175
    %v1247 = vpack.c.b16 %v1216, %v1215
    %v1248 = vpack.c.b16 %v1218, %v1217
    %v1249 = vpack.c.b16 %v1220, %v1219
    %v1250 = vpack.c.b16 %v1222, %v1221
    %v1251 = vpack.c.b16 %v1224, %v1223
    %v1252 = vpack.c.b16 %v1226, %v1225
    %v1253 = vpack.c.b16 %v1228, %v1227
    %v1254 = vpack.c.b16 %v1230, %v1229
    %v1255 = vpack.c.b16 %v1232, %v1231
    %v1256 = vpack.c.b16 %v1234, %v1233
    %v1257 = vpack.c.b16 %v1236, %v1235
    %v1258 = vpack.c.b16 %v1238, %v1237
    %v1259 = vpack.c.b16 %v1240, %v1239
    %v1260 = vpack.c.b16 %v1242, %v1241
    %v1261 = vpack.c.b16 %v1244, %v1243
    %v1262 = vpack.c.b16 %v1246, %v1245
    %1279 = vmatprep.subr.bf16.mxu0 0
    %1280 = vmatpush1.bf16.msra.mxu0 %v1254
    %1281 = vmatprep.subr.bf16.mxu0 0
    %1282 = vmatpush1.bf16.msra.mxu0 %v1253
    %1283 = vmatprep.subr.bf16.mxu0 0
    %1284 = vmatpush1.bf16.msra.mxu0 %v1252
    %1285 = vmatprep.subr.bf16.mxu0 0
    %1286 = vmatpush1.bf16.msra.mxu0 %v1251
    %1287 = vmatprep.subr.bf16.mxu0 0
    %1288 = vmatpush1.bf16.msra.mxu0 %v1250
    %1289 = vmatprep.subr.bf16.mxu0 0
    %1290 = vmatpush1.bf16.msra.mxu0 %v1249
    %1291 = vmatprep.subr.bf16.mxu0 0
    %1292 = vmatpush1.bf16.msra.mxu0 %v1248
    %1293 = vmatprep.subr.bf16.mxu0 0
    %1294 = vmatpush1.bf16.msra.mxu0 %v1247
    %1295 = vmatprep.subr.bf16.mxu0 0
    %1296 = vmatpush2.bf16.msra.mxu0 %v1262
    %1297 = vmatprep.subr.bf16.mxu0 0
    %1298 = vmatpush2.bf16.msra.mxu0 %v1261
    %1299 = vmatprep.subr.bf16.mxu0 0
    %1300 = vmatpush2.bf16.msra.mxu0 %v1260
    %1301 = vmatprep.subr.bf16.mxu0 0
    %1302 = vmatpush2.bf16.msra.mxu0 %v1259
    %1303 = vmatprep.subr.bf16.mxu0 0
    %1304 = vmatpush2.bf16.msra.mxu0 %v1258
    %1305 = vmatprep.subr.bf16.mxu0 0
    %1306 = vmatpush2.bf16.msra.mxu0 %v1257
    %1307 = vmatprep.subr.bf16.mxu0 0
    %1308 = vmatpush2.bf16.msra.mxu0 %v1256
    %1309 = vmatprep.subr.bf16.mxu0 0
    %1310 = vmatpush2.bf16.msra.mxu0 %v1255
    %1311 = vmatprep.mubr.bf16.mxu0 %v1133
    %1312 = vmatmul.mubr.bf16.gmra.mxu0 %v1132
    %v1313 = vpop.f32.mrf.mxu0
    %v1314 = vadd.f32 %v1181, %v1313
    %v1315 = vpop.f32.mrf.mxu0
    %v1316 = vpop.f32.mrf.mxu0
    %v1317 = vadd.f32 %v1181, %v1316
    %v1318 = vpop.f32.mrf.mxu0
    %1319 = vmatprep.mubr.bf16.mxu0 %v1135
    %1320 = vmatmul.mubr.bf16.gmra.mxu0 %v1134
    %v1321 = vpop.f32.mrf.mxu0
    %v1322 = vadd.f32 %v1181, %v1321
    %v1323 = vpop.f32.mrf.mxu0
    %v1324 = vpop.f32.mrf.mxu0
    %v1325 = vadd.f32 %v1181, %v1324
    %v1326 = vpop.f32.mrf.mxu0
    %1327 = vmatprep.mubr.bf16.mxu0 %v1137
    %1328 = vmatmul.mubr.bf16.gmra.mxu0 %v1136
    %v1329 = vpop.f32.mrf.mxu0
    %v1330 = vadd.f32 %v1181, %v1329
    %v1331 = vpop.f32.mrf.mxu0
    %v1332 = vpop.f32.mrf.mxu0
    %v1333 = vadd.f32 %v1181, %v1332
    %v1334 = vpop.f32.mrf.mxu0
    %1335 = vmatprep.mubr.bf16.mxu0 %v1139
    %1336 = vmatmul.mubr.bf16.gmra.mxu0 %v1138
    %v1337 = vpop.f32.mrf.mxu0
    %v1338 = vadd.f32 %v1181, %v1337
    %v1339 = vpop.f32.mrf.mxu0
    %v1340 = vpop.f32.mrf.mxu0
    %v1341 = vadd.f32 %v1181, %v1340
    %v1342 = vpop.f32.mrf.mxu0
    %1343 = vmatprep.mubr.bf16.mxu0 %v1141
    %1344 = vmatmul.mubr.bf16.gmra.mxu0 %v1140
    %v1345 = vpop.f32.mrf.mxu0
    %v1346 = vadd.f32 %v1181, %v1345
    %v1347 = vpop.f32.mrf.mxu0
    %v1348 = vpop.f32.mrf.mxu0
    %v1349 = vadd.f32 %v1181, %v1348
    %v1350 = vpop.f32.mrf.mxu0
    %1351 = vmatprep.mubr.bf16.mxu0 %v1143
    %1352 = vmatmul.mubr.bf16.gmra.mxu0 %v1142
    %v1353 = vpop.f32.mrf.mxu0
    %v1354 = vadd.f32 %v1181, %v1353
    %v1355 = vpop.f32.mrf.mxu0
    %v1356 = vpop.f32.mrf.mxu0
    %v1357 = vadd.f32 %v1181, %v1356
    %v1358 = vpop.f32.mrf.mxu0
    %1359 = vdwg.mxu0
    %v1360 = vmax.f32 %v1314, 0.0
    %v1361 = vmax.f32 %v1317, 0.0
    %v1362 = vmax.f32 %v1322, 0.0
    %v1363 = vmax.f32 %v1325, 0.0
    %v1364 = vmax.f32 %v1330, 0.0
    %v1365 = vmax.f32 %v1333, 0.0
    %v1366 = vmax.f32 %v1338, 0.0
    %v1367 = vmax.f32 %v1341, 0.0
    %v1368 = vmax.f32 %v1346, 0.0
    %v1369 = vmax.f32 %v1349, 0.0
    %v1370 = vmax.f32 %v1354, 0.0
    %v1371 = vmax.f32 %v1357, 0.0
    %v1372 = vpack.c.bf16 %v1361, %v1360
    %v1373 = vpack.c.bf16 %v1363, %v1362
    %v1374 = vpack.c.bf16 %v1365, %v1364
    %v1375 = vpack.c.bf16 %v1367, %v1366
    %v1376 = vpack.c.bf16 %v1369, %v1368
    %v1377 = vpack.c.bf16 %v1371, %v1370
    %v1378 = vld [vmem:[%s7] sm:$0xf]
    %1379 = vmatprep.subr.bf16.mxu0 0
    %1380 = vmatpush1.bf16.xpose.msra.mxu0 0
    %1381 = vmatprep.subr.bf16.mxu0 0
    %1382 = vmatpush1.bf16.xpose.msra.mxu0 0
    %1383 = vmatprep.subr.bf16.mxu0 0
    %1384 = vmatpush1.bf16.xpose.msra.mxu0 %v1377
    %1385 = vmatprep.subr.bf16.mxu0 0
    %1386 = vmatpush1.bf16.xpose.msra.mxu0 %v1376
    %1387 = vmatprep.subr.bf16.mxu0 0
    %1388 = vmatpush1.bf16.xpose.msra.mxu0 %v1375
    %1389 = vmatprep.subr.bf16.mxu0 0
    %1390 = vmatpush1.bf16.xpose.msra.mxu0 %v1374
    %1391 = vmatprep.subr.bf16.mxu0 0
    %1392 = vmatpush1.bf16.xpose.msra.mxu0 %v1373
    %1393 = vmatprep.subr.bf16.mxu0 0
    %1394 = vmatpush1.bf16.xpose.msra.mxu0 %v1372
    %1395 = vmatprep.subr.bf16.mxu0 0
    %1396 = vmatpush2.bf16.xpose.msra.mxu0 0
    %1397 = vmatprep.subr.bf16.mxu0 0
    %1398 = vmatpush2.bf16.xpose.msra.mxu0 0
    %1399 = vmatprep.subr.bf16.mxu0 0
    %1400 = vmatpush2.bf16.xpose.msra.mxu0 0
    %1401 = vmatprep.subr.bf16.mxu0 0
    %1402 = vmatpush2.bf16.xpose.msra.mxu0 0
    %1403 = vmatprep.subr.bf16.mxu0 0
    %1404 = vmatpush2.bf16.xpose.msra.mxu0 0
    %1405 = vmatprep.subr.bf16.mxu0 0
    %1406 = vmatpush2.bf16.xpose.msra.mxu0 0
    %1407 = vmatprep.subr.bf16.mxu0 0
    %1408 = vmatpush2.bf16.xpose.msra.mxu0 0
    %1409 = vmatprep.subr.bf16.mxu0 0
    %1410 = vmatpush2.bf16.xpose.msra.mxu0 0
    %1411 = vmatprep.mubr.bf16.mxu0 0
    %1412 = vmatmul.mubr.bf16.gmra.mxu0 %v1378
    %v1413 = vpop.f32.mrf.mxu0
    %v1414 = vadd.f32 0.0, %v1413
    %v1415 = vpop.f32.mrf.mxu0
    %v1416 = vpop.f32.mrf.mxu0
    %v1417 = vpop.f32.mrf.mxu0
    %1418 = vdwg.mxu0
    %v1419 = vld [vmem:[#allocation2] sm:$0x1]
    %1421 = vset.pattern.permute.xlu0 0
    %1422 = vperm.xlu0 %1421, %v1419
    %v1423 = vpop.permute.xlu0 %1422
    %v1425 = vlaneseq
    %v1426 = vshrl.u32 %v1425, 7
    %v1427 = vsub.s32 0, %v1426
    %v1428 = vrot.slane %v1423, %v1427
    %v1429 = vadd.f32 %v1414, %v1428
    %v1430 = vxor.u32 %v1429, 2147483648
    %v1431 = vmul.f32 %v1430, 1.442695
    %v1432 = vpow.pop %v1431
    %v1433 = vadd.f32 %v1432, 1.0
    %v1434 = vrcp.pop %v1433
    %v1435 = vmul.f32 1.0, %v1434
    %vm1436 = vcmask 778240
    %1437 = vst.msk [vmem:[#allocation3] sm:$0x1] %vm1436, %v1435
    // Predicated region
    $region38: #{discriminator_forward.1} parent=1 // pred_check
      _
    $region39: #{discriminator_forward.1} parent=1 // pred_check_branch
      %1439 = sbr.rel (0) target = $region41
    $region40: #{discriminator_forward.1} parent=1 // pred_region
      %s1441 = ssub.s32 16, 16
      %1442 = vsyncadd [#allocation4], %s1441
      %s1444 = sshll.u32 [#allocation3], 4
      %s1445 = int_to_ptr.vmem [resolvable:$true] %s1444
      %1447 = dma.vmem_to_hbm [thread:$0]  %s1445, 16, %s9, [#allocation4]
    $region41: #{discriminator_forward.1} parent=1 // pred_fallthru
      _
    // Predicated region
    $region42: #{discriminator_forward.1} parent=1 // pred_check
      _
    $region43: #{discriminator_forward.1} parent=1 // pred_check_branch
      %1449 = sbr.rel (0) target = $region45
    $region44: #{discriminator_forward.1} parent=1 // pred_region
      %1450 = dma.done [#allocation4], 16
    $region45: #{discriminator_forward.1} parent=1 // pred_fallthru
      _
    %1451 = vsyncpa [#allocation4], 1

</llo_original>
